<compile_context>
chip_gen: v6e
topology: v6e:2x2x1
jax: 0.10.0
libtpu: 0.0.40
codegen_flags: <defaults>
</compile_context>

<pallas_src>
import functools
import math

import numpy as np
import jax
import jax.numpy as jnp
from jax import lax
from jax.experimental import pallas as pl
from jax.experimental.pallas import tpu as pltpu


def _round_up(x, m):
    return ((x + m - 1) // m) * m


def _cdiv(a, b):
    return -(-a // b)


# ----------------------------------------------------------------------------
# Bicubic interpolation matrices (PyTorch F.interpolate(mode='bicubic',
# align_corners=False) convention, A = -0.75, border-clamped taps).
# ----------------------------------------------------------------------------
def _cubic_k1(t, A=-0.75):          # |t| <= 1
    return ((A + 2.0) * t - (A + 3.0)) * t * t + 1.0


def _cubic_k2(t, A=-0.75):          # 1 < |t| < 2
    return (((t - 5.0) * t + 8.0) * t - 4.0) * A


def bicubic_upsample_matrix(in_size, scale):
    out_size = int(math.floor(in_size * scale))
    m = np.zeros((out_size, in_size), np.float32)
    for i in range(out_size):
        src = (i + 0.5) / scale - 0.5
        x0 = int(math.floor(src))
        t = src - x0
        wts = (_cubic_k2(t + 1.0), _cubic_k1(t), _cubic_k1(1.0 - t), _cubic_k2(2.0 - t))
        for k in range(4):
            idx = min(max(x0 - 1 + k, 0), in_size - 1)
            m[i, idx] += wts[k]
    return jnp.asarray(m)           # (out_size, in_size)


# ----------------------------------------------------------------------------
# Kernel 1: NDVI / NDWI + bicubic upsample (whole batch in one call).
# ----------------------------------------------------------------------------
def _ndvi_ndwi_upsample_kernel(lms_ref, lh_ref, lwt_ref, o_ref):
    lms = lms_ref[...]                                  # (B, 4, h, w) f32
    lh = lh_ref[...]                                    # (H, h)
    lwt = lwt_ref[...]                                  # (w, W)
    nb = lms.shape[0]
    for b in range(nb):                                 # B is tiny and static
        green = lms[b, 1]
        red = lms[b, 2]
        nir = lms[b, 3]
        ndwi = (green - nir) * pl.reciprocal(green + nir, approx=True)
        ndvi = (nir - red) * pl.reciprocal(nir + red, approx=True)
        up_v = jnp.dot(jnp.dot(lh, ndvi, preferred_element_type=jnp.float32),
                       lwt, preferred_element_type=jnp.float32)
        up_w = jnp.dot(jnp.dot(lh, ndwi, preferred_element_type=jnp.float32),
                       lwt, preferred_element_type=jnp.float32)
        o_ref[b, 0, :, :] = up_v
        o_ref[b, 1, :, :] = up_w


def ndvi_ndwi_upsample_pallas(l_ms, lh, lw):
    B, c_ms, h, w = l_ms.shape
    H, W = lh.shape[0], lw.shape[0]
    lwt = jnp.transpose(lw)                             # (w, W)
    return pl.pallas_call(
        _ndvi_ndwi_upsample_kernel,
        out_shape=jax.ShapeDtypeStruct((B, 2, H, W), jnp.float32),
        grid=(1,),
        in_specs=[
            pl.BlockSpec((B, c_ms, h, w), lambda i: (0, 0, 0, 0)),
            pl.BlockSpec((H, h), lambda i: (0, 0)),
            pl.BlockSpec((w, W), lambda i: (0, 0)),
        ],
        out_specs=pl.BlockSpec((B, 2, H, W), lambda i: (0, 0, 0, 0)),
    )(l_ms.astype(jnp.float32), lh, lwt)


# ----------------------------------------------------------------------------
# Kernel 2: 'same' Conv2d (stride 1) + bias + ReLU, NCHW, (C, flat-spatial).
# Grouped-tap MXU matmuls (depth K*Cin) + register-resident per-M-tile acc.
# ----------------------------------------------------------------------------
def _conv_grouped_kernel(x_ref, w_ref, b_ref, o_ref, xstk_ref, *,
                         K, cin_pad, wp, mtile, n_tiles):
    # x_ref:    (cin_pad, P) bf16  — whole padded image for this batch
    # w_ref:    (K, cout, K*cin_pad) bf16 — per-dy grouped, lane-dense weights
    # b_ref:    (cout, 1) f32
    # o_ref:    (cout, M_pad)
    # xstk_ref: (K*cin_pad, mtile) bf16 VMEM scratch (per-dy stacked slices)
    cout = o_ref.shape[0]
    bias = b_ref[...]                                   # (cout, 1)
    for ti in range(n_tiles):                           # static M-tile loop
        base = ti * mtile
        acc = jnp.zeros((cout, mtile), jnp.float32)     # register-resident
        for dy in range(K):
            row = base + dy * wp
            for dx in range(K):
                xstk_ref[dx * cin_pad:(dx + 1) * cin_pad, :] = (
                    x_ref[:, pl.ds(row + dx, mtile)])
            acc = acc + jnp.dot(w_ref[dy], xstk_ref[...],
                                preferred_element_type=jnp.float32)
        res = jnp.maximum(acc + bias, 0.0)
        o_ref[:, pl.ds(base, mtile)] = res.astype(o_ref.dtype)


def conv2d_relu_pallas(x, w, b, pad, *, mtile_max=512, out_dtype=jnp.bfloat16):
    """x: (B, Cin, H, W); w: (Cout, Cin, K, K); b: (Cout,). Returns (B, Cout, H, W)."""
    B, cin, H, W = x.shape
    cout, cin2, K, K2 = w.shape
    assert cin == cin2 and K == K2 and 2 * pad + 1 == K

    cin_p = _round_up(cin, 8)                 # sublane-aligned channel count
    Wp = W + 2 * pad
    M = H * Wp                                # full padded-width rows, cols >= W dropped
    mtile = min(mtile_max, _round_up(M, 128))
    n_tiles = _cdiv(M, mtile)
    M_pad = n_tiles * mtile
    P_need = M_pad + (K - 1) * Wp + (K - 1)   # furthest tap read
    rows = _cdiv(P_need, Wp)                  # total padded rows (top pad + H + bottom pad)
    bot = rows - H - pad
    P = rows * Wp

    # One fused pad: channel pad to cin_p, spatial 'same' pad + bottom overrun rows.
    xp = jnp.pad(x.astype(jnp.bfloat16),
                 ((0, 0), (0, cin_p - cin), (pad, bot), (pad, pad)))
    xp = xp.reshape(B, cin_p, P)

    # Weights: (Cout, Cin, Kdy, Kdx) -> (Kdy, Cout, Kdx*Cin_pad), lane-dense bf16.
    wz = jnp.pad(w, ((0, 0), (0, cin_p - cin), (0, 0), (0, 0)))
    w_g = jnp.transpose(wz, (2, 0, 3, 1)).reshape(K, cout, K * cin_p).astype(jnp.bfloat16)
    b2 = b.reshape(cout, 1).astype(jnp.float32)

    # VMEM budget derived from the actual blocks (double-buffer factor 2) + slack.
    est = (2 * cin_p * P * 2
           + 2 * K * cout * K * cin_p * 2
           + 2 * cout * 4
           + 2 * cout * M_pad * jnp.dtype(out_dtype).itemsize
           + K * cin_p * mtile * 2)
    vmem_limit = int(min(max(2 * est + (4 << 20), 12 << 20), 48 << 20))

    kern = functools.partial(_conv_grouped_kernel, K=K, cin_pad=cin_p, wp=Wp,
                             mtile=mtile, n_tiles=n_tiles)
    out = pl.pallas_call(
        kern,
        out_shape=jax.ShapeDtypeStruct((B, cout, M_pad), out_dtype),
        grid=(B,),
        in_specs=[
            pl.BlockSpec((None, cin_p, P), lambda bb: (bb, 0, 0)),
            pl.BlockSpec((K, cout, K * cin_p), lambda bb: (0, 0, 0)),
            pl.BlockSpec((cout, 1), lambda bb: (0, 0)),
        ],
        out_specs=pl.BlockSpec((None, cout, M_pad), lambda bb: (bb, 0, 0)),
        scratch_shapes=[pltpu.VMEM((K * cin_p, mtile), jnp.bfloat16)],
        compiler_params=pltpu.CompilerParams(
            dimension_semantics=("parallel",),
            vmem_limit_bytes=vmem_limit,
        ),
    )(xp, w_g, b2)

    # (B, Cout, M_pad) -> (B, Cout, H, W): drop overrun positions and padded columns.
    return out[:, :, :M].reshape(B, cout, H, Wp)[:, :, :, :W]


# ----------------------------------------------------------------------------
# Full Net forward (Pallas path) and plain-JAX reference.
# ----------------------------------------------------------------------------
def net_forward(l_ms, b_ms, x_pan, params, upscale):
    h, w = l_ms.shape[2], l_ms.shape[3]
    lh = bicubic_upsample_matrix(h, upscale)      # (H, h)
    lw = bicubic_upsample_matrix(w, upscale)      # (W, w)
    nd = ndvi_ndwi_upsample_pallas(l_ms, lh, lw)  # (B, 2, H, W): [NDVI, NDWI]
    x_f = jnp.concatenate([b_ms, x_pan, nd], axis=1)      # (B, 7, H, W)

    (w1, b1), (w2, b2), (w3, b3) = params
    x_f = conv2d_relu_pallas(x_f, w1, b1, pad=4, out_dtype=jnp.bfloat16)   # head 7->48
    x_f = conv2d_relu_pallas(x_f, w2, b2, pad=2, out_dtype=jnp.bfloat16)   # body 48->32
    x_f = conv2d_relu_pallas(x_f, w3, b3, pad=2, out_dtype=jnp.float32)    # out  32->4
    return x_f


def net_reference(l_ms, b_ms, x_pan, params, upscale):
    """Plain-JAX (f32) replica of the PyTorch forward for correctness checking."""
    h, w = l_ms.shape[2], l_ms.shape[3]
    lh = bicubic_upsample_matrix(h, upscale)
    lw = bicubic_upsample_matrix(w, upscale)
    green, red, nir = l_ms[:, 1], l_ms[:, 2], l_ms[:, 3]
    ndwi = (green - nir) / (green + nir)
    ndvi = (nir - red) / (nir + red)
    up = lambda z: jnp.einsum('Hh,bhw,Ww->bHW', lh, z, lw)
    x_f = jnp.concatenate([b_ms, x_pan, up(ndvi)[:, None], up(ndwi)[:, None]], axis=1)

    def conv_relu(xx, wgt, bias, pad):
        y = lax.conv_general_dilated(
            xx, wgt, window_strides=(1, 1), padding=[(pad, pad), (pad, pad)],
            dimension_numbers=('NCHW', 'OIHW', 'NCHW'))
        return jax.nn.relu(y + bias[None, :, None, None])

    (w1, b1), (w2, b2), (w3, b3) = params
    x_f = conv_relu(x_f, w1, b1, 4)
    x_f = conv_relu(x_f, w2, b2, 2)
    x_f = conv_relu(x_f, w3, b3, 2)
    return x_f


def init_params(key):
    def xavier(k, shape):
        fan_in = shape[1] * shape[2] * shape[3]
        fan_out = shape[0] * shape[2] * shape[3]
        a = math.sqrt(6.0 / (fan_in + fan_out))
        return jax.random.uniform(k, shape, jnp.float32, -a, a)

    ks = jax.random.split(key, 6)
    w1 = xavier(ks[0], (48, 7, 9, 9))
    b1 = jax.random.normal(ks[1], (48,), jnp.float32) * 0.02
    w2 = xavier(ks[2], (32, 48, 5, 5))
    b2 = jax.random.normal(ks[3], (32,), jnp.float32) * 0.02
    w3 = xavier(ks[4], (4, 32, 5, 5))
    b3 = jax.random.normal(ks[5], (4,), jnp.float32) * 0.02
    return ((w1, b1), (w2, b2), (w3, b3))


if __name__ == "__main__":
    key = jax.random.PRNGKey(0)
    k1, k2, k3, kp = jax.random.split(key, 4)

    args = {'data': {'upsacle': 2}}            # same (typo'd) config key as the module
    upscale = args['data']['upsacle']

    B, h, w = 2, 8, 8
    H, W = h * upscale, w * upscale

    # Strictly positive band values so the NDVI/NDWI denominators are well conditioned.
    l_ms = jax.random.uniform(k1, (B, 4, h, w), jnp.float32, 0.2, 1.0)
    b_ms = jax.random.uniform(k2, (B, 4, H, W), jnp.float32, 0.0, 1.0)
    x_pan = jax.random.uniform(k3, (B, 1, H, W), jnp.float32, 0.0, 1.0)

    params = init_params(kp)

    out = net_forward(l_ms, b_ms, x_pan, params, upscale)
    out = jax.block_until_ready(out)

    ref = net_reference(l_ms, b_ms, x_pan, params, upscale)
    assert out.shape == ref.shape == (B, 4, H, W)
    max_err = float(jnp.max(jnp.abs(out - ref)))
    assert max_err < 5e-2, f"mismatch vs reference: max abs err {max_err}"

    print("KERNEL_OK")
</pallas_src>

<mosaic_0001>
module attributes {stable_mosaic.version = 11 : i64} {
  func.func @_ndvi_ndwi_upsample_kernel(%arg0: i32, %arg1: memref<2x4x8x8xf32, #tpu.memory_space<vmem>>, %arg2: memref<16x8xf32, #tpu.memory_space<vmem>>, %arg3: memref<8x16xf32, #tpu.memory_space<vmem>>, %arg4: memref<2x2x16x16xf32, #tpu.memory_space<vmem>>) attributes {dimension_semantics = [#tpu.dimension_semantics<arbitrary>], iteration_bounds = array<i64: 1>, scalar_prefetch = 0 : i64, scratch_operands = 0 : i64, tpu.core_type = #tpu.core_type<tc>, window_params = [{pipeline_mode = #tpu.pipeline_mode<synchronous>, transform_indices = @transform_0, window_bounds = array<i64: 2, 4, 8, 8>}, {pipeline_mode = #tpu.pipeline_mode<synchronous>, transform_indices = @transform_1, window_bounds = array<i64: 16, 8>}, {pipeline_mode = #tpu.pipeline_mode<synchronous>, transform_indices = @transform_2, window_bounds = array<i64: 8, 16>}, {pipeline_mode = #tpu.pipeline_mode<synchronous>, transform_indices = @transform_3, window_bounds = array<i64: 2, 2, 16, 16>}]} {
    %c0 = arith.constant 0 : index
    %c0_0 = arith.constant 0 : index
    %c0_1 = arith.constant 0 : index
    %c0_2 = arith.constant 0 : index
    %0 = vector.load %arg1[%c0, %c0_0, %c0_1, %c0_2] : memref<2x4x8x8xf32, #tpu.memory_space<vmem>>, vector<2x4x8x8xf32>
    %c0_3 = arith.constant 0 : index
    %c0_4 = arith.constant 0 : index
    %1 = vector.load %arg2[%c0_3, %c0_4] : memref<16x8xf32, #tpu.memory_space<vmem>>, vector<16x8xf32>
    %c0_5 = arith.constant 0 : index
    %c0_6 = arith.constant 0 : index
    %2 = vector.load %arg3[%c0_5, %c0_6] : memref<8x16xf32, #tpu.memory_space<vmem>>, vector<8x16xf32>
    %3 = vector.extract_strided_slice %0 {offsets = [0, 1, 0, 0], sizes = [1, 1, 8, 8], strides = [1, 1, 1, 1]} : vector<2x4x8x8xf32> to vector<1x1x8x8xf32>
    %4 = vector.shape_cast %3 : vector<1x1x8x8xf32> to vector<8x8xf32>
    %5 = vector.extract_strided_slice %0 {offsets = [0, 2, 0, 0], sizes = [1, 1, 8, 8], strides = [1, 1, 1, 1]} : vector<2x4x8x8xf32> to vector<1x1x8x8xf32>
    %6 = vector.shape_cast %5 : vector<1x1x8x8xf32> to vector<8x8xf32>
    %7 = vector.extract_strided_slice %0 {offsets = [0, 3, 0, 0], sizes = [1, 1, 8, 8], strides = [1, 1, 1, 1]} : vector<2x4x8x8xf32> to vector<1x1x8x8xf32>
    %8 = vector.shape_cast %7 : vector<1x1x8x8xf32> to vector<8x8xf32>
    %9 = arith.subf %4, %8 : vector<8x8xf32>
    %10 = arith.addf %4, %8 : vector<8x8xf32>
    %11 = tpu.reciprocal %10 {approx = true} : vector<8x8xf32> -> vector<8x8xf32>
    %12 = arith.mulf %9, %11 : vector<8x8xf32>
    %13 = arith.subf %8, %6 : vector<8x8xf32>
    %14 = arith.addf %8, %6 : vector<8x8xf32>
    %15 = tpu.reciprocal %14 {approx = true} : vector<8x8xf32> -> vector<8x8xf32>
    %16 = arith.mulf %13, %15 : vector<8x8xf32>
    %cst = arith.constant dense<0.000000e+00> : vector<16x8xf32>
    %17 = tpu.matmul %1, %16, %cst {dimension_numbers = #tpu.dot_dimension_numbers<[1], [0], [0], [1], [0, 0, 1, 1], [], []>} : vector<16x8xf32>, vector<8x8xf32>, vector<16x8xf32> -> vector<16x8xf32>
    %cst_7 = arith.constant dense<0.000000e+00> : vector<16x16xf32>
    %18 = tpu.matmul %17, %2, %cst_7 {dimension_numbers = #tpu.dot_dimension_numbers<[1], [0], [0], [1], [0, 0, 1, 1], [], []>} : vector<16x8xf32>, vector<8x16xf32>, vector<16x16xf32> -> vector<16x16xf32>
    %cst_8 = arith.constant dense<0.000000e+00> : vector<16x8xf32>
    %19 = tpu.matmul %1, %12, %cst_8 {dimension_numbers = #tpu.dot_dimension_numbers<[1], [0], [0], [1], [0, 0, 1, 1], [], []>} : vector<16x8xf32>, vector<8x8xf32>, vector<16x8xf32> -> vector<16x8xf32>
    %cst_9 = arith.constant dense<0.000000e+00> : vector<16x16xf32>
    %20 = tpu.matmul %19, %2, %cst_9 {dimension_numbers = #tpu.dot_dimension_numbers<[1], [0], [0], [1], [0, 0, 1, 1], [], []>} : vector<16x8xf32>, vector<8x16xf32>, vector<16x16xf32> -> vector<16x16xf32>
    %c0_10 = arith.constant 0 : index
    %c0_11 = arith.constant 0 : index
    %c0_12 = arith.constant 0 : index
    %c0_13 = arith.constant 0 : index
    %21 = vector.load %arg4[%c0_10, %c0_11, %c0_12, %c0_13] : memref<2x2x16x16xf32, #tpu.memory_space<vmem>>, vector<1x1x16x16xf32>
    %22 = vector.shape_cast %21 : vector<1x1x16x16xf32> to vector<16x16xf32>
    %23 = vector.shape_cast %18 : vector<16x16xf32> to vector<1x1x16x16xf32>
    tpu.vector_store %arg4[%c0_10, %c0_11, %c0_12, %c0_13], %23 {strides = array<i32>} : memref<2x2x16x16xf32, #tpu.memory_space<vmem>>, vector<1x1x16x16xf32>,
    %c0_14 = arith.constant 0 : index
    %c1 = arith.constant 1 : index
    %c0_15 = arith.constant 0 : index
    %c0_16 = arith.constant 0 : index
    %24 = vector.load %arg4[%c0_14, %c1, %c0_15, %c0_16] : memref<2x2x16x16xf32, #tpu.memory_space<vmem>>, vector<1x1x16x16xf32>
    %25 = vector.shape_cast %24 : vector<1x1x16x16xf32> to vector<16x16xf32>
    %26 = vector.shape_cast %20 : vector<16x16xf32> to vector<1x1x16x16xf32>
    tpu.vector_store %arg4[%c0_14, %c1, %c0_15, %c0_16], %26 {strides = array<i32>} : memref<2x2x16x16xf32, #tpu.memory_space<vmem>>, vector<1x1x16x16xf32>,
    %27 = vector.extract_strided_slice %0 {offsets = [1, 1, 0, 0], sizes = [1, 1, 8, 8], strides = [1, 1, 1, 1]} : vector<2x4x8x8xf32> to vector<1x1x8x8xf32>
    %28 = vector.shape_cast %27 : vector<1x1x8x8xf32> to vector<8x8xf32>
    %29 = vector.extract_strided_slice %0 {offsets = [1, 2, 0, 0], sizes = [1, 1, 8, 8], strides = [1, 1, 1, 1]} : vector<2x4x8x8xf32> to vector<1x1x8x8xf32>
    %30 = vector.shape_cast %29 : vector<1x1x8x8xf32> to vector<8x8xf32>
    %31 = vector.extract_strided_slice %0 {offsets = [1, 3, 0, 0], sizes = [1, 1, 8, 8], strides = [1, 1, 1, 1]} : vector<2x4x8x8xf32> to vector<1x1x8x8xf32>
    %32 = vector.shape_cast %31 : vector<1x1x8x8xf32> to vector<8x8xf32>
    %33 = arith.subf %28, %32 : vector<8x8xf32>
    %34 = arith.addf %28, %32 : vector<8x8xf32>
    %35 = tpu.reciprocal %34 {approx = true} : vector<8x8xf32> -> vector<8x8xf32>
    %36 = arith.mulf %33, %35 : vector<8x8xf32>
    %37 = arith.subf %32, %30 : vector<8x8xf32>
    %38 = arith.addf %32, %30 : vector<8x8xf32>
    %39 = tpu.reciprocal %38 {approx = true} : vector<8x8xf32> -> vector<8x8xf32>
    %40 = arith.mulf %37, %39 : vector<8x8xf32>
    %cst_17 = arith.constant dense<0.000000e+00> : vector<16x8xf32>
    %41 = tpu.matmul %1, %40, %cst_17 {dimension_numbers = #tpu.dot_dimension_numbers<[1], [0], [0], [1], [0, 0, 1, 1], [], []>} : vector<16x8xf32>, vector<8x8xf32>, vector<16x8xf32> -> vector<16x8xf32>
    %cst_18 = arith.constant dense<0.000000e+00> : vector<16x16xf32>
    %42 = tpu.matmul %41, %2, %cst_18 {dimension_numbers = #tpu.dot_dimension_numbers<[1], [0], [0], [1], [0, 0, 1, 1], [], []>} : vector<16x8xf32>, vector<8x16xf32>, vector<16x16xf32> -> vector<16x16xf32>
    %cst_19 = arith.constant dense<0.000000e+00> : vector<16x8xf32>
    %43 = tpu.matmul %1, %36, %cst_19 {dimension_numbers = #tpu.dot_dimension_numbers<[1], [0], [0], [1], [0, 0, 1, 1], [], []>} : vector<16x8xf32>, vector<8x8xf32>, vector<16x8xf32> -> vector<16x8xf32>
    %cst_20 = arith.constant dense<0.000000e+00> : vector<16x16xf32>
    %44 = tpu.matmul %43, %2, %cst_20 {dimension_numbers = #tpu.dot_dimension_numbers<[1], [0], [0], [1], [0, 0, 1, 1], [], []>} : vector<16x8xf32>, vector<8x16xf32>, vector<16x16xf32> -> vector<16x16xf32>
    %c1_21 = arith.constant 1 : index
    %c0_22 = arith.constant 0 : index
    %c0_23 = arith.constant 0 : index
    %c0_24 = arith.constant 0 : index
    %45 = vector.load %arg4[%c1_21, %c0_22, %c0_23, %c0_24] : memref<2x2x16x16xf32, #tpu.memory_space<vmem>>, vector<1x1x16x16xf32>
    %46 = vector.shape_cast %45 : vector<1x1x16x16xf32> to vector<16x16xf32>
    %47 = vector.shape_cast %42 : vector<16x16xf32> to vector<1x1x16x16xf32>
    tpu.vector_store %arg4[%c1_21, %c0_22, %c0_23, %c0_24], %47 {strides = array<i32>} : memref<2x2x16x16xf32, #tpu.memory_space<vmem>>, vector<1x1x16x16xf32>,
    %c1_25 = arith.constant 1 : index
    %c1_26 = arith.constant 1 : index
    %c0_27 = arith.constant 0 : index
    %c0_28 = arith.constant 0 : index
    %48 = vector.load %arg4[%c1_25, %c1_26, %c0_27, %c0_28] : memref<2x2x16x16xf32, #tpu.memory_space<vmem>>, vector<1x1x16x16xf32>
    %49 = vector.shape_cast %48 : vector<1x1x16x16xf32> to vector<16x16xf32>
    %50 = vector.shape_cast %44 : vector<16x16xf32> to vector<1x1x16x16xf32>
    tpu.vector_store %arg4[%c1_25, %c1_26, %c0_27, %c0_28], %50 {strides = array<i32>} : memref<2x2x16x16xf32, #tpu.memory_space<vmem>>, vector<1x1x16x16xf32>,
    return
  }
  func.func @transform_0(%arg0: i32) -> (i32, i32, i32, i32) {
    %c0_i32 = arith.constant 0 : i32
    %c0_i32_0 = arith.constant 0 : i32
    %c0_i32_1 = arith.constant 0 : i32
    %c0_i32_2 = arith.constant 0 : i32
    %c0_i32_3 = arith.constant 0 : i32
    return %c0_i32, %c0_i32_0, %c0_i32_1, %c0_i32_2 : i32, i32, i32, i32
  }
  func.func @transform_1(%arg0: i32) -> (i32, i32) {
    %c0_i32 = arith.constant 0 : i32
    %c0_i32_0 = arith.constant 0 : i32
    %c0_i32_1 = arith.constant 0 : i32
    return %c0_i32, %c0_i32_0 : i32, i32
  }
  func.func @transform_2(%arg0: i32) -> (i32, i32) {
    %c0_i32 = arith.constant 0 : i32
    %c0_i32_0 = arith.constant 0 : i32
    %c0_i32_1 = arith.constant 0 : i32
    return %c0_i32, %c0_i32_0 : i32, i32
  }
  func.func @transform_3(%arg0: i32) -> (i32, i32, i32, i32) {
    %c0_i32 = arith.constant 0 : i32
    %c0_i32_0 = arith.constant 0 : i32
    %c0_i32_1 = arith.constant 0 : i32
    %c0_i32_2 = arith.constant 0 : i32
    %c0_i32_3 = arith.constant 0 : i32
    return %c0_i32, %c0_i32_0, %c0_i32_1, %c0_i32_2 : i32, i32, i32, i32
  }
}

</mosaic_0001>

<llo_original>
// kernel: tpu_custom_call.1
$region0: #{tpu_custom_call.1}
  #allocation0 [shape = 'u32[]', space=smem, size = 0x4, offset = 0x4, fixed_abs, tag = 'smem constant byte address 0x4 - core index']
  #allocation1 [shape = 'u32[144,128]{1,0:T(1,128)}', space=vmem, size = 0x12000, scoped, tag = 'internal scratch']
  %s0 = inlined_call_operand.hbm [shape: f32[2,4,8,8], index: 0, kind: input, shape index: {}]
  %s1 = inlined_call_operand.vmem [shape: f32[16,8], index: 1, kind: input, shape index: {}]
  %s2 = inlined_call_operand.vmem [shape: f32[8,16], index: 2, kind: input, shape index: {}]
  %s3 = inlined_call_operand.hbm [shape: f32[2,2,16,16], index: 3, kind: output, shape index: {}]
  %s4 = sld [smem:[#allocation0]]
  $region26: #{tpu_custom_call.1} parent=0
    _
  %s6 = ssub.s32 1, %s4
  %s7 = scalar_select 0, %s6, %s4
  $region1: #{tpu_custom_call.1} parent=0
    #allocation2 [shape = 'u8[32768]{0}', space=vmem, size = 0x8000, scoped, tag = 'input window, operand 0, single buffered']
    #allocation3 [shape = 's32[1]{0}', space=sflag, size = 0x4, scoped, tag = 'scoped memory for tpu_custom_call.1']
    #allocation4 [shape = 's32[1]{0}', space=sflag, size = 0x4, scoped, tag = 'scoped memory for tpu_custom_call.1']
    #allocation5 [shape = 'u8[32768]{0}', space=vmem, size = 0x8000, scoped, tag = 'output window, operand 0, single buffered']
    %8 = vsyncpa [#allocation3], 0
    %9 = vsyncpa [#allocation4], 0
    // Predicated region
    $region2: #{tpu_custom_call.1} parent=1 // pred_check
      _
    $region3: #{tpu_custom_call.1} parent=1 // pred_check_branch
      %11 = sbr.rel (0) target = $region5
    $region4: #{tpu_custom_call.1} parent=1 // pred_region
      %s13 = ssub.s32 1024, 1024
      %14 = vsyncadd [#allocation3], %s13
      %s15 = sshll.u32 [#allocation2], 4
      %s16 = int_to_ptr.vmem [resolvable:$true] %s15
      %21 = dma.hbm_to_vmem [thread:$0]  %s0, 1024, %s16, [#allocation3], 128, 128, 8
    $region5: #{tpu_custom_call.1} parent=1 // pred_fallthru
      _
    // Predicated region
    $region6: #{tpu_custom_call.1} parent=1 // pred_check
      _
    $region7: #{tpu_custom_call.1} parent=1 // pred_check_branch
      %23 = sbr.rel (0) target = $region9
    $region8: #{tpu_custom_call.1} parent=1 // pred_region
      _
    $region9: #{tpu_custom_call.1} parent=1 // pred_fallthru
      _
    // Predicated region
    $region10: #{tpu_custom_call.1} parent=1 // pred_check
      _
    $region11: #{tpu_custom_call.1} parent=1 // pred_check_branch
      %25 = sbr.rel (0) target = $region13
    $region12: #{tpu_custom_call.1} parent=1 // pred_region
      _
    $region13: #{tpu_custom_call.1} parent=1 // pred_fallthru
      _
    // Predicated region
    $region14: #{tpu_custom_call.1} parent=1 // pred_check
      _
    $region15: #{tpu_custom_call.1} parent=1 // pred_check_branch
      %27 = sbr.rel (0) target = $region17
    $region16: #{tpu_custom_call.1} parent=1 // pred_region
      %28 = dma.done [#allocation3], 1024
    $region17: #{tpu_custom_call.1} parent=1 // pred_fallthru
      _
    %v29 = vld [vmem:[#allocation2 + $0x8] sm:$0xff]
    %v30 = vld [vmem:[#allocation2 + $0x10] sm:$0xff]
    %v31 = vld [vmem:[#allocation2 + $0x18] sm:$0xff]
    %v32 = vld [vmem:[#allocation2 + $0x28] sm:$0xff]
    %v33 = vld [vmem:[#allocation2 + $0x30] sm:$0xff]
    %v34 = vld [vmem:[#allocation2 + $0x38] sm:$0xff]
    %v35 = vld [vmem:[%s1] sm:$0xff]
    %v36 = vld [vmem:[%s1 + $0x8] sm:$0xff]
    %v37 = vld [vmem:[%s2] sm:$0xff]
    %v38 = vsub.f32 %v29, %v31
    %v39 = vadd.f32 %v29, %v31
    %v40 = vrcp.pop %v39
    %v41 = vmul.f32 %v38, %v40
    %v42 = vsub.f32 %v31, %v30
    %v43 = vadd.f32 %v31, %v30
    %v44 = vrcp.pop %v43
    %v45 = vmul.f32 %v42, %v44
    %vm46 = vcmask 64512
    %v48 = vsel %vm46, %v35, 0
    %v51 = vsel %vm46, %v36, 0
    %53 = vmatprep.subr.mxu0 0.0
    %54 = vmatpush1.msra.mxu0 0.0
    %55 = vmatprep.subr.mxu0 0.0
    %56 = vmatpush1.msra.mxu0 0.0
    %57 = vmatprep.subr.mxu0 0.0
    %58 = vmatpush1.msra.mxu0 0.0
    %59 = vmatprep.subr.mxu0 0.0
    %60 = vmatpush1.msra.mxu0 0.0
    %61 = vmatprep.subr.mxu0 0.0
    %62 = vmatpush1.msra.mxu0 0.0
    %63 = vmatprep.subr.mxu0 0.0
    %64 = vmatpush1.msra.mxu0 0.0
    %65 = vmatprep.subr.mxu0 0.0
    %66 = vmatpush1.msra.mxu0 0.0
    %67 = vmatprep.subr.mxu0 0.0
    %68 = vmatpush1.msra.mxu0 0.0
    %69 = vmatprep.subr.mxu0 0.0
    %70 = vmatpush1.msra.mxu0 0.0
    %71 = vmatprep.subr.mxu0 0.0
    %72 = vmatpush1.msra.mxu0 0.0
    %73 = vmatprep.subr.mxu0 0.0
    %74 = vmatpush1.msra.mxu0 0.0
    %75 = vmatprep.subr.mxu0 0.0
    %76 = vmatpush1.msra.mxu0 0.0
    %77 = vmatprep.subr.mxu0 0.0
    %78 = vmatpush1.msra.mxu0 0.0
    %79 = vmatprep.subr.mxu0 0.0
    %80 = vmatpush1.msra.mxu0 0.0
    %81 = vmatprep.subr.mxu0 0.0
    %82 = vmatpush1.msra.mxu0 0.0
    %83 = vmatprep.subr.mxu0 0.0
    %84 = vmatpush1.msra.mxu0 %v45
    %85 = vmatprep.subr.mxu0 0.0
    %86 = vmatpush2.msra.mxu0 0.0
    %87 = vmatprep.subr.mxu0 0.0
    %88 = vmatpush2.msra.mxu0 0.0
    %89 = vmatprep.subr.mxu0 0.0
    %90 = vmatpush2.msra.mxu0 0.0
    %91 = vmatprep.subr.mxu0 0.0
    %92 = vmatpush2.msra.mxu0 0.0
    %93 = vmatprep.subr.mxu0 0.0
    %94 = vmatpush2.msra.mxu0 0.0
    %95 = vmatprep.subr.mxu0 0.0
    %96 = vmatpush2.msra.mxu0 0.0
    %97 = vmatprep.subr.mxu0 0.0
    %98 = vmatpush2.msra.mxu0 0.0
    %99 = vmatprep.subr.mxu0 0.0
    %100 = vmatpush2.msra.mxu0 0.0
    %101 = vmatprep.subr.mxu0 0.0
    %102 = vmatpush2.msra.mxu0 0.0
    %103 = vmatprep.subr.mxu0 0.0
    %104 = vmatpush2.msra.mxu0 0.0
    %105 = vmatprep.subr.mxu0 0.0
    %106 = vmatpush2.msra.mxu0 0.0
    %107 = vmatprep.subr.mxu0 0.0
    %108 = vmatpush2.msra.mxu0 0.0
    %109 = vmatprep.subr.mxu0 0.0
    %110 = vmatpush2.msra.mxu0 0.0
    %111 = vmatprep.subr.mxu0 0.0
    %112 = vmatpush2.msra.mxu0 0.0
    %113 = vmatprep.subr.mxu0 0.0
    %114 = vmatpush2.msra.mxu0 0.0
    %115 = vmatprep.subr.mxu0 0.0
    %116 = vmatpush2.msra.mxu0 0.0
    %117 = vmatprep.mubr.f32.mxu0 0.0
    %118 = vmatmul.mubr.f32.gmra.mxu0 %v48
    %v119 = vpop.f32.mrf.mxu0
    %v120 = vadd.f32 0.0, %v119
    %v121 = vpop.f32.mrf.mxu0
    %122 = vmatprep.mubr.f32.mxu0 0.0
    %123 = vmatmul.mubr.f32.gmra.mxu0 %v51
    %v124 = vpop.f32.mrf.mxu0
    %v125 = vadd.f32 0.0, %v124
    %v126 = vpop.f32.mrf.mxu0
    %127 = vdwg.mxu0
    %v129 = vsel %vm46, %v120, 0
    %v132 = vsel %vm46, %v125, 0
    %134 = vmatprep.subr.mxu0 0.0
    %135 = vmatpush1.msra.mxu0 0.0
    %136 = vmatprep.subr.mxu0 0.0
    %137 = vmatpush1.msra.mxu0 0.0
    %138 = vmatprep.subr.mxu0 0.0
    %139 = vmatpush1.msra.mxu0 0.0
    %140 = vmatprep.subr.mxu0 0.0
    %141 = vmatpush1.msra.mxu0 0.0
    %142 = vmatprep.subr.mxu0 0.0
    %143 = vmatpush1.msra.mxu0 0.0
    %144 = vmatprep.subr.mxu0 0.0
    %145 = vmatpush1.msra.mxu0 0.0
    %146 = vmatprep.subr.mxu0 0.0
    %147 = vmatpush1.msra.mxu0 0.0
    %148 = vmatprep.subr.mxu0 0.0
    %149 = vmatpush1.msra.mxu0 0.0
    %150 = vmatprep.subr.mxu0 0.0
    %151 = vmatpush1.msra.mxu0 0.0
    %152 = vmatprep.subr.mxu0 0.0
    %153 = vmatpush1.msra.mxu0 0.0
    %154 = vmatprep.subr.mxu0 0.0
    %155 = vmatpush1.msra.mxu0 0.0
    %156 = vmatprep.subr.mxu0 0.0
    %157 = vmatpush1.msra.mxu0 0.0
    %158 = vmatprep.subr.mxu0 0.0
    %159 = vmatpush1.msra.mxu0 0.0
    %160 = vmatprep.subr.mxu0 0.0
    %161 = vmatpush1.msra.mxu0 0.0
    %162 = vmatprep.subr.mxu0 0.0
    %163 = vmatpush1.msra.mxu0 0.0
    %164 = vmatprep.subr.mxu0 0.0
    %165 = vmatpush1.msra.mxu0 %v37
    %166 = vmatprep.subr.mxu0 0.0
    %167 = vmatpush2.msra.mxu0 0.0
    %168 = vmatprep.subr.mxu0 0.0
    %169 = vmatpush2.msra.mxu0 0.0
    %170 = vmatprep.subr.mxu0 0.0
    %171 = vmatpush2.msra.mxu0 0.0
    %172 = vmatprep.subr.mxu0 0.0
    %173 = vmatpush2.msra.mxu0 0.0
    %174 = vmatprep.subr.mxu0 0.0
    %175 = vmatpush2.msra.mxu0 0.0
    %176 = vmatprep.subr.mxu0 0.0
    %177 = vmatpush2.msra.mxu0 0.0
    %178 = vmatprep.subr.mxu0 0.0
    %179 = vmatpush2.msra.mxu0 0.0
    %180 = vmatprep.subr.mxu0 0.0
    %181 = vmatpush2.msra.mxu0 0.0
    %182 = vmatprep.subr.mxu0 0.0
    %183 = vmatpush2.msra.mxu0 0.0
    %184 = vmatprep.subr.mxu0 0.0
    %185 = vmatpush2.msra.mxu0 0.0
    %186 = vmatprep.subr.mxu0 0.0
    %187 = vmatpush2.msra.mxu0 0.0
    %188 = vmatprep.subr.mxu0 0.0
    %189 = vmatpush2.msra.mxu0 0.0
    %190 = vmatprep.subr.mxu0 0.0
    %191 = vmatpush2.msra.mxu0 0.0
    %192 = vmatprep.subr.mxu0 0.0
    %193 = vmatpush2.msra.mxu0 0.0
    %194 = vmatprep.subr.mxu0 0.0
    %195 = vmatpush2.msra.mxu0 0.0
    %196 = vmatprep.subr.mxu0 0.0
    %197 = vmatpush2.msra.mxu0 0.0
    %198 = vmatprep.mubr.f32.mxu0 0.0
    %199 = vmatmul.mubr.f32.gmra.mxu0 %v129
    %v200 = vpop.f32.mrf.mxu0
    %v201 = vadd.f32 0.0, %v200
    %v202 = vpop.f32.mrf.mxu0
    %203 = vmatprep.mubr.f32.mxu0 0.0
    %204 = vmatmul.mubr.f32.gmra.mxu0 %v132
    %v205 = vpop.f32.mrf.mxu0
    %v206 = vadd.f32 0.0, %v205
    %v207 = vpop.f32.mrf.mxu0
    %208 = vdwg.mxu0
    %209 = vmatprep.subr.mxu0 0.0
    %210 = vmatpush1.msra.mxu0 0.0
    %211 = vmatprep.subr.mxu0 0.0
    %212 = vmatpush1.msra.mxu0 0.0
    %213 = vmatprep.subr.mxu0 0.0
    %214 = vmatpush1.msra.mxu0 0.0
    %215 = vmatprep.subr.mxu0 0.0
    %216 = vmatpush1.msra.mxu0 0.0
    %217 = vmatprep.subr.mxu0 0.0
    %218 = vmatpush1.msra.mxu0 0.0
    %219 = vmatprep.subr.mxu0 0.0
    %220 = vmatpush1.msra.mxu0 0.0
    %221 = vmatprep.subr.mxu0 0.0
    %222 = vmatpush1.msra.mxu0 0.0
    %223 = vmatprep.subr.mxu0 0.0
    %224 = vmatpush1.msra.mxu0 0.0
    %225 = vmatprep.subr.mxu0 0.0
    %226 = vmatpush1.msra.mxu0 0.0
    %227 = vmatprep.subr.mxu0 0.0
    %228 = vmatpush1.msra.mxu0 0.0
    %229 = vmatprep.subr.mxu0 0.0
    %230 = vmatpush1.msra.mxu0 0.0
    %231 = vmatprep.subr.mxu0 0.0
    %232 = vmatpush1.msra.mxu0 0.0
    %233 = vmatprep.subr.mxu0 0.0
    %234 = vmatpush1.msra.mxu0 0.0
    %235 = vmatprep.subr.mxu0 0.0
    %236 = vmatpush1.msra.mxu0 0.0
    %237 = vmatprep.subr.mxu0 0.0
    %238 = vmatpush1.msra.mxu0 0.0
    %239 = vmatprep.subr.mxu0 0.0
    %240 = vmatpush1.msra.mxu0 %v41
    %241 = vmatprep.subr.mxu0 0.0
    %242 = vmatpush2.msra.mxu0 0.0
    %243 = vmatprep.subr.mxu0 0.0
    %244 = vmatpush2.msra.mxu0 0.0
    %245 = vmatprep.subr.mxu0 0.0
    %246 = vmatpush2.msra.mxu0 0.0
    %247 = vmatprep.subr.mxu0 0.0
    %248 = vmatpush2.msra.mxu0 0.0
    %249 = vmatprep.subr.mxu0 0.0
    %250 = vmatpush2.msra.mxu0 0.0
    %251 = vmatprep.subr.mxu0 0.0
    %252 = vmatpush2.msra.mxu0 0.0
    %253 = vmatprep.subr.mxu0 0.0
    %254 = vmatpush2.msra.mxu0 0.0
    %255 = vmatprep.subr.mxu0 0.0
    %256 = vmatpush2.msra.mxu0 0.0
    %257 = vmatprep.subr.mxu0 0.0
    %258 = vmatpush2.msra.mxu0 0.0
    %259 = vmatprep.subr.mxu0 0.0
    %260 = vmatpush2.msra.mxu0 0.0
    %261 = vmatprep.subr.mxu0 0.0
    %262 = vmatpush2.msra.mxu0 0.0
    %263 = vmatprep.subr.mxu0 0.0
    %264 = vmatpush2.msra.mxu0 0.0
    %265 = vmatprep.subr.mxu0 0.0
    %266 = vmatpush2.msra.mxu0 0.0
    %267 = vmatprep.subr.mxu0 0.0
    %268 = vmatpush2.msra.mxu0 0.0
    %269 = vmatprep.subr.mxu0 0.0
    %270 = vmatpush2.msra.mxu0 0.0
    %271 = vmatprep.subr.mxu0 0.0
    %272 = vmatpush2.msra.mxu0 0.0
    %273 = vmatprep.mubr.f32.mxu0 0.0
    %274 = vmatmul.mubr.f32.gmra.mxu0 %v48
    %v275 = vpop.f32.mrf.mxu0
    %v276 = vadd.f32 0.0, %v275
    %v277 = vpop.f32.mrf.mxu0
    %278 = vmatprep.mubr.f32.mxu0 0.0
    %279 = vmatmul.mubr.f32.gmra.mxu0 %v51
    %v280 = vpop.f32.mrf.mxu0
    %v281 = vadd.f32 0.0, %v280
    %v282 = vpop.f32.mrf.mxu0
    %283 = vdwg.mxu0
    %v285 = vsel %vm46, %v276, 0
    %v288 = vsel %vm46, %v281, 0
    %290 = vmatprep.subr.mxu0 0.0
    %291 = vmatpush1.msra.mxu0 0.0
    %292 = vmatprep.subr.mxu0 0.0
    %293 = vmatpush1.msra.mxu0 0.0
    %294 = vmatprep.subr.mxu0 0.0
    %295 = vmatpush1.msra.mxu0 0.0
    %296 = vmatprep.subr.mxu0 0.0
    %297 = vmatpush1.msra.mxu0 0.0
    %298 = vmatprep.subr.mxu0 0.0
    %299 = vmatpush1.msra.mxu0 0.0
    %300 = vmatprep.subr.mxu0 0.0
    %301 = vmatpush1.msra.mxu0 0.0
    %302 = vmatprep.subr.mxu0 0.0
    %303 = vmatpush1.msra.mxu0 0.0
    %304 = vmatprep.subr.mxu0 0.0
    %305 = vmatpush1.msra.mxu0 0.0
    %306 = vmatprep.subr.mxu0 0.0
    %307 = vmatpush1.msra.mxu0 0.0
    %308 = vmatprep.subr.mxu0 0.0
    %309 = vmatpush1.msra.mxu0 0.0
    %310 = vmatprep.subr.mxu0 0.0
    %311 = vmatpush1.msra.mxu0 0.0
    %312 = vmatprep.subr.mxu0 0.0
    %313 = vmatpush1.msra.mxu0 0.0
    %314 = vmatprep.subr.mxu0 0.0
    %315 = vmatpush1.msra.mxu0 0.0
    %316 = vmatprep.subr.mxu0 0.0
    %317 = vmatpush1.msra.mxu0 0.0
    %318 = vmatprep.subr.mxu0 0.0
    %319 = vmatpush1.msra.mxu0 0.0
    %320 = vmatprep.subr.mxu0 0.0
    %321 = vmatpush1.msra.mxu0 %v37
    %322 = vmatprep.subr.mxu0 0.0
    %323 = vmatpush2.msra.mxu0 0.0
    %324 = vmatprep.subr.mxu0 0.0
    %325 = vmatpush2.msra.mxu0 0.0
    %326 = vmatprep.subr.mxu0 0.0
    %327 = vmatpush2.msra.mxu0 0.0
    %328 = vmatprep.subr.mxu0 0.0
    %329 = vmatpush2.msra.mxu0 0.0
    %330 = vmatprep.subr.mxu0 0.0
    %331 = vmatpush2.msra.mxu0 0.0
    %332 = vmatprep.subr.mxu0 0.0
    %333 = vmatpush2.msra.mxu0 0.0
    %334 = vmatprep.subr.mxu0 0.0
    %335 = vmatpush2.msra.mxu0 0.0
    %336 = vmatprep.subr.mxu0 0.0
    %337 = vmatpush2.msra.mxu0 0.0
    %338 = vmatprep.subr.mxu0 0.0
    %339 = vmatpush2.msra.mxu0 0.0
    %340 = vmatprep.subr.mxu0 0.0
    %341 = vmatpush2.msra.mxu0 0.0
    %342 = vmatprep.subr.mxu0 0.0
    %343 = vmatpush2.msra.mxu0 0.0
    %344 = vmatprep.subr.mxu0 0.0
    %345 = vmatpush2.msra.mxu0 0.0
    %346 = vmatprep.subr.mxu0 0.0
    %347 = vmatpush2.msra.mxu0 0.0
    %348 = vmatprep.subr.mxu0 0.0
    %349 = vmatpush2.msra.mxu0 0.0
    %350 = vmatprep.subr.mxu0 0.0
    %351 = vmatpush2.msra.mxu0 0.0
    %352 = vmatprep.subr.mxu0 0.0
    %353 = vmatpush2.msra.mxu0 0.0
    %354 = vmatprep.mubr.f32.mxu0 0.0
    %355 = vmatmul.mubr.f32.gmra.mxu0 %v285
    %v356 = vpop.f32.mrf.mxu0
    %v357 = vadd.f32 0.0, %v356
    %v358 = vpop.f32.mrf.mxu0
    %359 = vmatprep.mubr.f32.mxu0 0.0
    %360 = vmatmul.mubr.f32.gmra.mxu0 %v288
    %v361 = vpop.f32.mrf.mxu0
    %v362 = vadd.f32 0.0, %v361
    %v363 = vpop.f32.mrf.mxu0
    %364 = vdwg.mxu0
    %vm365 = vcmask 130048
    %366 = vst.msk [vmem:[#allocation5] sm:$0xff] %vm365, %v201
    %367 = vst.msk [vmem:[#allocation5 + $0x8] sm:$0xff] %vm365, %v206
    %s368 = scalar_lea.vmem [#allocation5], 16
    %369 = vst.msk [vmem:[%s368] sm:$0xff] %vm365, %v357
    %370 = vst.msk [vmem:[%s368 + $0x8] sm:$0xff] %vm365, %v362
    %v371 = vsub.f32 %v32, %v34
    %v372 = vadd.f32 %v32, %v34
    %v373 = vrcp.pop %v372
    %v374 = vmul.f32 %v371, %v373
    %v375 = vsub.f32 %v34, %v33
    %v376 = vadd.f32 %v34, %v33
    %v377 = vrcp.pop %v376
    %v378 = vmul.f32 %v375, %v377
    %379 = vmatprep.subr.mxu0 0.0
    %380 = vmatpush1.msra.mxu0 0.0
    %381 = vmatprep.subr.mxu0 0.0
    %382 = vmatpush1.msra.mxu0 0.0
    %383 = vmatprep.subr.mxu0 0.0
    %384 = vmatpush1.msra.mxu0 0.0
    %385 = vmatprep.subr.mxu0 0.0
    %386 = vmatpush1.msra.mxu0 0.0
    %387 = vmatprep.subr.mxu0 0.0
    %388 = vmatpush1.msra.mxu0 0.0
    %389 = vmatprep.subr.mxu0 0.0
    %390 = vmatpush1.msra.mxu0 0.0
    %391 = vmatprep.subr.mxu0 0.0
    %392 = vmatpush1.msra.mxu0 0.0
    %393 = vmatprep.subr.mxu0 0.0
    %394 = vmatpush1.msra.mxu0 0.0
    %395 = vmatprep.subr.mxu0 0.0
    %396 = vmatpush1.msra.mxu0 0.0
    %397 = vmatprep.subr.mxu0 0.0
    %398 = vmatpush1.msra.mxu0 0.0
    %399 = vmatprep.subr.mxu0 0.0
    %400 = vmatpush1.msra.mxu0 0.0
    %401 = vmatprep.subr.mxu0 0.0
    %402 = vmatpush1.msra.mxu0 0.0
    %403 = vmatprep.subr.mxu0 0.0
    %404 = vmatpush1.msra.mxu0 0.0
    %405 = vmatprep.subr.mxu0 0.0
    %406 = vmatpush1.msra.mxu0 0.0
    %407 = vmatprep.subr.mxu0 0.0
    %408 = vmatpush1.msra.mxu0 0.0
    %409 = vmatprep.subr.mxu0 0.0
    %410 = vmatpush1.msra.mxu0 %v378
    %411 = vmatprep.subr.mxu0 0.0
    %412 = vmatpush2.msra.mxu0 0.0
    %413 = vmatprep.subr.mxu0 0.0
    %414 = vmatpush2.msra.mxu0 0.0
    %415 = vmatprep.subr.mxu0 0.0
    %416 = vmatpush2.msra.mxu0 0.0
    %417 = vmatprep.subr.mxu0 0.0
    %418 = vmatpush2.msra.mxu0 0.0
    %419 = vmatprep.subr.mxu0 0.0
    %420 = vmatpush2.msra.mxu0 0.0
    %421 = vmatprep.subr.mxu0 0.0
    %422 = vmatpush2.msra.mxu0 0.0
    %423 = vmatprep.subr.mxu0 0.0
    %424 = vmatpush2.msra.mxu0 0.0
    %425 = vmatprep.subr.mxu0 0.0
    %426 = vmatpush2.msra.mxu0 0.0
    %427 = vmatprep.subr.mxu0 0.0
    %428 = vmatpush2.msra.mxu0 0.0
    %429 = vmatprep.subr.mxu0 0.0
    %430 = vmatpush2.msra.mxu0 0.0
    %431 = vmatprep.subr.mxu0 0.0
    %432 = vmatpush2.msra.mxu0 0.0
    %433 = vmatprep.subr.mxu0 0.0
    %434 = vmatpush2.msra.mxu0 0.0
    %435 = vmatprep.subr.mxu0 0.0
    %436 = vmatpush2.msra.mxu0 0.0
    %437 = vmatprep.subr.mxu0 0.0
    %438 = vmatpush2.msra.mxu0 0.0
    %439 = vmatprep.subr.mxu0 0.0
    %440 = vmatpush2.msra.mxu0 0.0
    %441 = vmatprep.subr.mxu0 0.0
    %442 = vmatpush2.msra.mxu0 0.0
    %443 = vmatprep.mubr.f32.mxu0 0.0
    %444 = vmatmul.mubr.f32.gmra.mxu0 %v48
    %v445 = vpop.f32.mrf.mxu0
    %v446 = vadd.f32 0.0, %v445
    %v447 = vpop.f32.mrf.mxu0
    %448 = vmatprep.mubr.f32.mxu0 0.0
    %449 = vmatmul.mubr.f32.gmra.mxu0 %v51
    %v450 = vpop.f32.mrf.mxu0
    %v451 = vadd.f32 0.0, %v450
    %v452 = vpop.f32.mrf.mxu0
    %453 = vdwg.mxu0
    %v455 = vsel %vm46, %v446, 0
    %v458 = vsel %vm46, %v451, 0
    %460 = vmatprep.subr.mxu0 0.0
    %461 = vmatpush1.msra.mxu0 0.0
    %462 = vmatprep.subr.mxu0 0.0
    %463 = vmatpush1.msra.mxu0 0.0
    %464 = vmatprep.subr.mxu0 0.0
    %465 = vmatpush1.msra.mxu0 0.0
    %466 = vmatprep.subr.mxu0 0.0
    %467 = vmatpush1.msra.mxu0 0.0
    %468 = vmatprep.subr.mxu0 0.0
    %469 = vmatpush1.msra.mxu0 0.0
    %470 = vmatprep.subr.mxu0 0.0
    %471 = vmatpush1.msra.mxu0 0.0
    %472 = vmatprep.subr.mxu0 0.0
    %473 = vmatpush1.msra.mxu0 0.0
    %474 = vmatprep.subr.mxu0 0.0
    %475 = vmatpush1.msra.mxu0 0.0
    %476 = vmatprep.subr.mxu0 0.0
    %477 = vmatpush1.msra.mxu0 0.0
    %478 = vmatprep.subr.mxu0 0.0
    %479 = vmatpush1.msra.mxu0 0.0
    %480 = vmatprep.subr.mxu0 0.0
    %481 = vmatpush1.msra.mxu0 0.0
    %482 = vmatprep.subr.mxu0 0.0
    %483 = vmatpush1.msra.mxu0 0.0
    %484 = vmatprep.subr.mxu0 0.0
    %485 = vmatpush1.msra.mxu0 0.0
    %486 = vmatprep.subr.mxu0 0.0
    %487 = vmatpush1.msra.mxu0 0.0
    %488 = vmatprep.subr.mxu0 0.0
    %489 = vmatpush1.msra.mxu0 0.0
    %490 = vmatprep.subr.mxu0 0.0
    %491 = vmatpush1.msra.mxu0 %v37
    %492 = vmatprep.subr.mxu0 0.0
    %493 = vmatpush2.msra.mxu0 0.0
    %494 = vmatprep.subr.mxu0 0.0
    %495 = vmatpush2.msra.mxu0 0.0
    %496 = vmatprep.subr.mxu0 0.0
    %497 = vmatpush2.msra.mxu0 0.0
    %498 = vmatprep.subr.mxu0 0.0
    %499 = vmatpush2.msra.mxu0 0.0
    %500 = vmatprep.subr.mxu0 0.0
    %501 = vmatpush2.msra.mxu0 0.0
    %502 = vmatprep.subr.mxu0 0.0
    %503 = vmatpush2.msra.mxu0 0.0
    %504 = vmatprep.subr.mxu0 0.0
    %505 = vmatpush2.msra.mxu0 0.0
    %506 = vmatprep.subr.mxu0 0.0
    %507 = vmatpush2.msra.mxu0 0.0
    %508 = vmatprep.subr.mxu0 0.0
    %509 = vmatpush2.msra.mxu0 0.0
    %510 = vmatprep.subr.mxu0 0.0
    %511 = vmatpush2.msra.mxu0 0.0
    %512 = vmatprep.subr.mxu0 0.0
    %513 = vmatpush2.msra.mxu0 0.0
    %514 = vmatprep.subr.mxu0 0.0
    %515 = vmatpush2.msra.mxu0 0.0
    %516 = vmatprep.subr.mxu0 0.0
    %517 = vmatpush2.msra.mxu0 0.0
    %518 = vmatprep.subr.mxu0 0.0
    %519 = vmatpush2.msra.mxu0 0.0
    %520 = vmatprep.subr.mxu0 0.0
    %521 = vmatpush2.msra.mxu0 0.0
    %522 = vmatprep.subr.mxu0 0.0
    %523 = vmatpush2.msra.mxu0 0.0
    %524 = vmatprep.mubr.f32.mxu0 0.0
    %525 = vmatmul.mubr.f32.gmra.mxu0 %v455
    %v526 = vpop.f32.mrf.mxu0
    %v527 = vadd.f32 0.0, %v526
    %v528 = vpop.f32.mrf.mxu0
    %529 = vmatprep.mubr.f32.mxu0 0.0
    %530 = vmatmul.mubr.f32.gmra.mxu0 %v458
    %v531 = vpop.f32.mrf.mxu0
    %v532 = vadd.f32 0.0, %v531
    %v533 = vpop.f32.mrf.mxu0
    %534 = vdwg.mxu0
    %535 = vmatprep.subr.mxu0 0.0
    %536 = vmatpush1.msra.mxu0 0.0
    %537 = vmatprep.subr.mxu0 0.0
    %538 = vmatpush1.msra.mxu0 0.0
    %539 = vmatprep.subr.mxu0 0.0
    %540 = vmatpush1.msra.mxu0 0.0
    %541 = vmatprep.subr.mxu0 0.0
    %542 = vmatpush1.msra.mxu0 0.0
    %543 = vmatprep.subr.mxu0 0.0
    %544 = vmatpush1.msra.mxu0 0.0
    %545 = vmatprep.subr.mxu0 0.0
    %546 = vmatpush1.msra.mxu0 0.0
    %547 = vmatprep.subr.mxu0 0.0
    %548 = vmatpush1.msra.mxu0 0.0
    %549 = vmatprep.subr.mxu0 0.0
    %550 = vmatpush1.msra.mxu0 0.0
    %551 = vmatprep.subr.mxu0 0.0
    %552 = vmatpush1.msra.mxu0 0.0
    %553 = vmatprep.subr.mxu0 0.0
    %554 = vmatpush1.msra.mxu0 0.0
    %555 = vmatprep.subr.mxu0 0.0
    %556 = vmatpush1.msra.mxu0 0.0
    %557 = vmatprep.subr.mxu0 0.0
    %558 = vmatpush1.msra.mxu0 0.0
    %559 = vmatprep.subr.mxu0 0.0
    %560 = vmatpush1.msra.mxu0 0.0
    %561 = vmatprep.subr.mxu0 0.0
    %562 = vmatpush1.msra.mxu0 0.0
    %563 = vmatprep.subr.mxu0 0.0
    %564 = vmatpush1.msra.mxu0 0.0
    %565 = vmatprep.subr.mxu0 0.0
    %566 = vmatpush1.msra.mxu0 %v374
    %567 = vmatprep.subr.mxu0 0.0
    %568 = vmatpush2.msra.mxu0 0.0
    %569 = vmatprep.subr.mxu0 0.0
    %570 = vmatpush2.msra.mxu0 0.0
    %571 = vmatprep.subr.mxu0 0.0
    %572 = vmatpush2.msra.mxu0 0.0
    %573 = vmatprep.subr.mxu0 0.0
    %574 = vmatpush2.msra.mxu0 0.0
    %575 = vmatprep.subr.mxu0 0.0
    %576 = vmatpush2.msra.mxu0 0.0
    %577 = vmatprep.subr.mxu0 0.0
    %578 = vmatpush2.msra.mxu0 0.0
    %579 = vmatprep.subr.mxu0 0.0
    %580 = vmatpush2.msra.mxu0 0.0
    %581 = vmatprep.subr.mxu0 0.0
    %582 = vmatpush2.msra.mxu0 0.0
    %583 = vmatprep.subr.mxu0 0.0
    %584 = vmatpush2.msra.mxu0 0.0
    %585 = vmatprep.subr.mxu0 0.0
    %586 = vmatpush2.msra.mxu0 0.0
    %587 = vmatprep.subr.mxu0 0.0
    %588 = vmatpush2.msra.mxu0 0.0
    %589 = vmatprep.subr.mxu0 0.0
    %590 = vmatpush2.msra.mxu0 0.0
    %591 = vmatprep.subr.mxu0 0.0
    %592 = vmatpush2.msra.mxu0 0.0
    %593 = vmatprep.subr.mxu0 0.0
    %594 = vmatpush2.msra.mxu0 0.0
    %595 = vmatprep.subr.mxu0 0.0
    %596 = vmatpush2.msra.mxu0 0.0
    %597 = vmatprep.subr.mxu0 0.0
    %598 = vmatpush2.msra.mxu0 0.0
    %599 = vmatprep.mubr.f32.mxu0 0.0
    %600 = vmatmul.mubr.f32.gmra.mxu0 %v48
    %v601 = vpop.f32.mrf.mxu0
    %v602 = vadd.f32 0.0, %v601
    %v603 = vpop.f32.mrf.mxu0
    %604 = vmatprep.mubr.f32.mxu0 0.0
    %605 = vmatmul.mubr.f32.gmra.mxu0 %v51
    %v606 = vpop.f32.mrf.mxu0
    %v607 = vadd.f32 0.0, %v606
    %v608 = vpop.f32.mrf.mxu0
    %609 = vdwg.mxu0
    %v611 = vsel %vm46, %v602, 0
    %v614 = vsel %vm46, %v607, 0
    %616 = vmatprep.subr.mxu0 0.0
    %617 = vmatpush1.msra.mxu0 0.0
    %618 = vmatprep.subr.mxu0 0.0
    %619 = vmatpush1.msra.mxu0 0.0
    %620 = vmatprep.subr.mxu0 0.0
    %621 = vmatpush1.msra.mxu0 0.0
    %622 = vmatprep.subr.mxu0 0.0
    %623 = vmatpush1.msra.mxu0 0.0
    %624 = vmatprep.subr.mxu0 0.0
    %625 = vmatpush1.msra.mxu0 0.0
    %626 = vmatprep.subr.mxu0 0.0
    %627 = vmatpush1.msra.mxu0 0.0
    %628 = vmatprep.subr.mxu0 0.0
    %629 = vmatpush1.msra.mxu0 0.0
    %630 = vmatprep.subr.mxu0 0.0
    %631 = vmatpush1.msra.mxu0 0.0
    %632 = vmatprep.subr.mxu0 0.0
    %633 = vmatpush1.msra.mxu0 0.0
    %634 = vmatprep.subr.mxu0 0.0
    %635 = vmatpush1.msra.mxu0 0.0
    %636 = vmatprep.subr.mxu0 0.0
    %637 = vmatpush1.msra.mxu0 0.0
    %638 = vmatprep.subr.mxu0 0.0
    %639 = vmatpush1.msra.mxu0 0.0
    %640 = vmatprep.subr.mxu0 0.0
    %641 = vmatpush1.msra.mxu0 0.0
    %642 = vmatprep.subr.mxu0 0.0
    %643 = vmatpush1.msra.mxu0 0.0
    %644 = vmatprep.subr.mxu0 0.0
    %645 = vmatpush1.msra.mxu0 0.0
    %646 = vmatprep.subr.mxu0 0.0
    %647 = vmatpush1.msra.mxu0 %v37
    %648 = vmatprep.subr.mxu0 0.0
    %649 = vmatpush2.msra.mxu0 0.0
    %650 = vmatprep.subr.mxu0 0.0
    %651 = vmatpush2.msra.mxu0 0.0
    %652 = vmatprep.subr.mxu0 0.0
    %653 = vmatpush2.msra.mxu0 0.0
    %654 = vmatprep.subr.mxu0 0.0
    %655 = vmatpush2.msra.mxu0 0.0
    %656 = vmatprep.subr.mxu0 0.0
    %657 = vmatpush2.msra.mxu0 0.0
    %658 = vmatprep.subr.mxu0 0.0
    %659 = vmatpush2.msra.mxu0 0.0
    %660 = vmatprep.subr.mxu0 0.0
    %661 = vmatpush2.msra.mxu0 0.0
    %662 = vmatprep.subr.mxu0 0.0
    %663 = vmatpush2.msra.mxu0 0.0
    %664 = vmatprep.subr.mxu0 0.0
    %665 = vmatpush2.msra.mxu0 0.0
    %666 = vmatprep.subr.mxu0 0.0
    %667 = vmatpush2.msra.mxu0 0.0
    %668 = vmatprep.subr.mxu0 0.0
    %669 = vmatpush2.msra.mxu0 0.0
    %670 = vmatprep.subr.mxu0 0.0
    %671 = vmatpush2.msra.mxu0 0.0
    %672 = vmatprep.subr.mxu0 0.0
    %673 = vmatpush2.msra.mxu0 0.0
    %674 = vmatprep.subr.mxu0 0.0
    %675 = vmatpush2.msra.mxu0 0.0
    %676 = vmatprep.subr.mxu0 0.0
    %677 = vmatpush2.msra.mxu0 0.0
    %678 = vmatprep.subr.mxu0 0.0
    %679 = vmatpush2.msra.mxu0 0.0
    %680 = vmatprep.mubr.f32.mxu0 0.0
    %681 = vmatmul.mubr.f32.gmra.mxu0 %v611
    %v682 = vpop.f32.mrf.mxu0
    %v683 = vadd.f32 0.0, %v682
    %v684 = vpop.f32.mrf.mxu0
    %685 = vmatprep.mubr.f32.mxu0 0.0
    %686 = vmatmul.mubr.f32.gmra.mxu0 %v614
    %v687 = vpop.f32.mrf.mxu0
    %v688 = vadd.f32 0.0, %v687
    %v689 = vpop.f32.mrf.mxu0
    %690 = vdwg.mxu0
    %s691 = scalar_lea.vmem [#allocation5], 32
    %692 = vst.msk [vmem:[%s691] sm:$0xff] %vm365, %v527
    %693 = vst.msk [vmem:[%s691 + $0x8] sm:$0xff] %vm365, %v532
    %s694 = scalar_lea.vmem [#allocation5], 48
    %695 = vst.msk [vmem:[%s694] sm:$0xff] %vm365, %v683
    %696 = vst.msk [vmem:[%s694 + $0x8] sm:$0xff] %vm365, %v688
    // Predicated region
    $region18: #{tpu_custom_call.1} parent=1 // pred_check
      _
    $region19: #{tpu_custom_call.1} parent=1 // pred_check_branch
      %698 = sbr.rel (0) target = $region21
    $region20: #{tpu_custom_call.1} parent=1 // pred_region
      %s700 = ssub.s32 1024, 1024
      %701 = vsyncadd [#allocation4], %s700
      %s702 = sshll.u32 [#allocation5], 4
      %s703 = int_to_ptr.vmem [resolvable:$true] %s702
      %708 = dma.vmem_to_hbm [thread:$0]  %s703, 1024, %s3, [#allocation4], 128, 128, 8
    $region21: #{tpu_custom_call.1} parent=1 // pred_fallthru
      _
    // Predicated region
    $region22: #{tpu_custom_call.1} parent=1 // pred_check
      _
    $region23: #{tpu_custom_call.1} parent=1 // pred_check_branch
      %710 = sbr.rel (0) target = $region25
    $region24: #{tpu_custom_call.1} parent=1 // pred_region
      %711 = dma.done [#allocation4], 1024
    $region25: #{tpu_custom_call.1} parent=1 // pred_fallthru
      _
    %712 = vsyncpa [#allocation3], 1
    %713 = vsyncpa [#allocation4], 1

</llo_original>
